<compile_context>
chip_gen: v5e
topology: v5e:2x2
jax: 0.10.0
libtpu: 0.0.40
codegen_flags: <defaults>
</compile_context>

<pallas_src>
import functools

import jax
import jax.numpy as jnp
from jax.experimental import pallas as pl
from jax.experimental.pallas import tpu as pltpu

# ---- deterministic "args" configuration ------------------------------------
GAMMA_NEG = 4.0
GAMMA_POS = 0.05
CLIP = 0.05
ALPHA_POS = None          # args.alpha_pos
ALPHA_NEG = None          # args.alpha_neg
PARTIAL_LOSS_MODE = "negative"


def _asl_kernel(logits_ref, targets_ref, out_ref, *,
                gamma_neg, gamma_pos, clip, alpha_pos, alpha_neg,
                tile_b, tile_c, valid_b, valid_c, mask_rows, mask_cols):
    # Zero the resident per-batch-tile accumulator on the first class step.
    @pl.when(pl.program_id(1) == 0)
    def _():
        out_ref[...] = jnp.zeros_like(out_ref)

    logits = logits_ref[...].astype(jnp.float32)
    targets = targets_ref[...].astype(jnp.float32)

    # edit_targets_parital_labels, mode 'negative':
    #   targets[targets == -1] = 0 ; targets_weights = 1.0
    targets = jnp.where(targets == -1.0, 0.0, targets)
    # TODO(synk): partial_loss_mode == 'negative_backprop' needs a global
    # argsort + scatter over flattened class scores, and 'real_partial' needs
    # a targets_weights mask; neither is implemented as a Pallas kernel here.
    is_pos = targets == 1.0            # targets are now in {0, 1}

    # Sigmoid as a single EUP tanh (instead of exp + reciprocal).
    xs_pos = 0.5 * jnp.tanh(0.5 * logits) + 0.5
    xs_neg = 1.0 - xs_pos
    if clip is not None and clip > 0:
        xs_neg = jnp.minimum(xs_neg + clip, 1.0)

    # With t in {0,1}:  t*log(xs_pos) + (1-t)*log(xs_neg)  ==  log(p),
    # p = probability assigned to the ground-truth label.  One log, not two.
    p = jnp.where(is_pos, xs_pos, xs_neg)
    bce = jnp.log(jnp.maximum(p, 1e-8))
    if alpha_pos is not None or alpha_neg is not None:
        a_pos = 1.0 if alpha_pos is None else float(alpha_pos)
        a_neg = 1.0 if alpha_neg is None else float(alpha_neg)
        bce = bce * jnp.where(is_pos, a_pos, a_neg)

    # Asymmetric focusing weight.  Base 1 - xs_pos*t - xs_neg*(1-t) == (1-p),
    # so pow(1-p, w) == exp(w * log(1-p)).  w > 0 always, so 1-p == 0 yields
    # exp(-inf) == 0, matching pow(0, w).  (torch computes this under no_grad;
    # forward value is identical and pallas_call defines no autodiff path.)
    w = jnp.where(is_pos, gamma_pos, gamma_neg)
    loss = bce * jnp.exp(w * jnp.log(1.0 - p))
    # targets_weights == 1.0 for partial_loss_mode='negative' -> no-op multiply.

    # Zero out garbage rows / columns of the (unpadded) tail blocks.  These
    # selects are only emitted when the shape is actually ragged.
    if mask_rows:
        row_ids = (jax.lax.broadcasted_iota(jnp.int32, (tile_b, tile_c), 0)
                   + pl.program_id(0) * tile_b)
        loss = jnp.where(row_ids < valid_b, loss, 0.0)
    if mask_cols:
        col_ids = (jax.lax.broadcasted_iota(jnp.int32, (tile_b, tile_c), 1)
                   + pl.program_id(1) * tile_c)
        loss = jnp.where(col_ids < valid_c, loss, 0.0)

    # Fold the (tile_b, tile_c) tile into the resident (8,128) accumulator
    # with plain VPU adds of vreg-sized slices, spread over up to 4
    # independent chains so the adds are not serialized on one dep chain.
    n_r, n_c = tile_b // 8, tile_c // 128
    n_chains = min(4, n_r * n_c)
    accs = [out_ref[...]] + [jnp.zeros((8, 128), jnp.float32)
                             for _ in range(n_chains - 1)]
    k = 0
    for r in range(n_r):
        for c in range(n_c):
            accs[k % n_chains] = (
                accs[k % n_chains]
                + loss[r * 8:(r + 1) * 8, c * 128:(c + 1) * 128])
            k += 1
    while len(accs) > 1:                       # balanced tree combine
        accs = [accs[i] + accs[i + 1] if i + 1 < len(accs) else accs[i]
                for i in range(0, len(accs), 2)]
    out_ref[...] = accs[0]


def _round_up(x, m):
    return (x + m - 1) // m * m


def _sublane_multiple(dtype):
    # Packed-tile alignment: f32 -> 8 rows, bf16 -> 16, int8/fp8 -> 32.
    return max(8, 32 // jnp.dtype(dtype).itemsize)


def asymmetric_loss(logits, targets, *, target_block_bytes=1024 * 1024):
    """Pallas implementation of AsymmetricLoss.forward (training=True)."""
    B, C = logits.shape
    assert targets.shape == (B, C)

    row_align = max(_sublane_multiple(logits.dtype),
                    _sublane_multiple(targets.dtype))

    # Class (lane) tiling: multiple of 128, capped so VMEM use is bounded
    # independently of num_classes.
    tile_c = min(_round_up(C, 128), 512)
    nc = pl.cdiv(C, tile_c)

    # Batch (sublane) tiling: as many rows as fit the per-block byte target
    # (~1 MiB/block -> 2 inputs x 2 pipeline buffers ~= 4 MiB, comfortably
    # within every generation's budget, including v7x's 64 MiB VMEM).
    b_aligned = _round_up(B, row_align)
    rows_budget = max(row_align,
                      (target_block_bytes // (tile_c * 4)) // row_align * row_align)
    tile_b = min(b_aligned, rows_budget)
    # Keep >= 2 batch tiles whenever the batch can be split so the 'parallel'
    # axis can feed both TensorCores on v7x (harmless on 1-TC v5e/v6e).
    if b_aligned >= 2 * row_align:
        tile_b = min(tile_b, _round_up(pl.cdiv(b_aligned, 2), row_align))
    nb = pl.cdiv(B, tile_b)

    kernel = functools.partial(
        _asl_kernel,
        gamma_neg=GAMMA_NEG, gamma_pos=GAMMA_POS, clip=CLIP,
        alpha_pos=ALPHA_POS, alpha_neg=ALPHA_NEG,
        tile_b=tile_b, tile_c=tile_c,
        valid_b=B, valid_c=C,
        mask_rows=(B % tile_b) != 0, mask_cols=(C % tile_c) != 0,
    )

    partials = pl.pallas_call(
        kernel,
        out_shape=jax.ShapeDtypeStruct((nb * 8, 128), jnp.float32),
        grid_spec=pltpu.PrefetchScalarGridSpec(
            num_scalar_prefetch=0,
            grid=(nb, nc),
            in_specs=[
                pl.BlockSpec((tile_b, tile_c), lambda i, j: (i, j)),
                pl.BlockSpec((tile_b, tile_c), lambda i, j: (i, j)),
            ],
            # One (8,128) partial-sum block per batch tile; the index map
            # ignores the class axis, so the block stays VMEM-resident and
            # acts as the accumulator across the reduction.
            out_specs=pl.BlockSpec((8, 128), lambda i, j: (i, 0)),
        ),
        compiler_params=pltpu.CompilerParams(
            # Batch tiles are independent (own output blocks) -> megacore-able
            # on v7x; class axis carries the running sum -> 'arbitrary'.
            dimension_semantics=("parallel", "arbitrary"),
            vmem_limit_bytes=32 * 1024 * 1024,
        ),
    )(logits, targets)

    # The single tiny cross-lane reduction, once, outside the kernel.
    return -jnp.sum(partials)


def asymmetric_loss_ref(logits, targets):
    """Pure-JAX reference mirroring the PyTorch forward (full formula)."""
    logits = logits.astype(jnp.float32)
    targets = targets.astype(jnp.float32)
    targets = jnp.where(targets == -1.0, 0.0, targets)
    xs_pos = jax.nn.sigmoid(logits)
    xs_neg = 1.0 - xs_pos
    anti_targets = 1.0 - targets
    xs_neg = jnp.minimum(xs_neg + CLIP, 1.0)
    bce = targets * jnp.log(jnp.maximum(xs_pos, 1e-8))
    bce = bce + anti_targets * jnp.log(jnp.maximum(xs_neg, 1e-8))
    asym_w = jnp.power(
        1.0 - xs_pos * targets - xs_neg * anti_targets,
        GAMMA_POS * targets + GAMMA_NEG * anti_targets,
    )
    return -jnp.sum(bce * asym_w)


if __name__ == "__main__":
    key = jax.random.PRNGKey(0)
    fn = jax.jit(asymmetric_loss)

    # One aligned case and one ragged case (exercises tail-block masking).
    for (B, C) in [(16, 128), (12, 120)]:
        key, k_logit, k_tgt = jax.random.split(key, 3)
        logits = jax.random.normal(k_logit, (B, C), dtype=jnp.float32)
        # targets in {-1, 0, 1}: -1 = unknown (partial label), 0 = neg, 1 = pos
        targets = jax.random.randint(
            k_tgt, (B, C), minval=-1, maxval=2).astype(jnp.float32)

        loss = jax.block_until_ready(fn(logits, targets))
        ref = asymmetric_loss_ref(logits, targets)
        assert jnp.allclose(loss, ref, rtol=1e-4, atol=1e-3), (B, C, loss, ref)

    print("KERNEL_OK")
</pallas_src>

<mosaic_0001>
module attributes {stable_mosaic.version = 11 : i64} {
  func.func @_asl_kernel(%arg0: i32, %arg1: i32, %arg2: memref<8x128xf32, #tpu.memory_space<vmem>>, %arg3: memref<8x128xf32, #tpu.memory_space<vmem>>, %arg4: memref<8x128xf32, #tpu.memory_space<vmem>>) attributes {dimension_semantics = [#tpu.dimension_semantics<parallel>, #tpu.dimension_semantics<arbitrary>], iteration_bounds = array<i64: 2, 1>, scalar_prefetch = 0 : i64, scratch_operands = 0 : i64, tpu.core_type = #tpu.core_type<tc>, window_params = [{transform_indices = @transform_0, window_bounds = array<i64: 8, 128>}, {transform_indices = @transform_1, window_bounds = array<i64: 8, 128>}, {transform_indices = @transform_2, window_bounds = array<i64: 8, 128>}]} {
    %c0_i32 = arith.constant 0 : i32
    %0 = arith.cmpi eq, %arg1, %c0_i32 : i32
    %1 = arith.extui %0 : i1 to i32
    %c0_i32_0 = arith.constant 0 : i32
    %2 = arith.cmpi ne, %1, %c0_i32_0 : i32
    scf.if %2 {
      %cst_20 = arith.constant 0.000000e+00 : f32
      %40 = vector.broadcast %cst_20 : f32 to vector<8x128xf32>
      %c0_21 = arith.constant 0 : index
      %c0_22 = arith.constant 0 : index
      %41 = vector.load %arg4[%c0_21, %c0_22] : memref<8x128xf32, #tpu.memory_space<vmem>>, vector<8x128xf32>
      tpu.vector_store %arg4[%c0_21, %c0_22], %40 {strides = array<i32>} : memref<8x128xf32, #tpu.memory_space<vmem>>, vector<8x128xf32>,
    } else {
    }
    %c0 = arith.constant 0 : index
    %c0_1 = arith.constant 0 : index
    %3 = vector.load %arg2[%c0, %c0_1] : memref<8x128xf32, #tpu.memory_space<vmem>>, vector<8x128xf32>
    %c0_2 = arith.constant 0 : index
    %c0_3 = arith.constant 0 : index
    %4 = vector.load %arg3[%c0_2, %c0_3] : memref<8x128xf32, #tpu.memory_space<vmem>>, vector<8x128xf32>
    %cst = arith.constant -1.000000e+00 : f32
    %5 = vector.broadcast %cst : f32 to vector<8x128xf32>
    %6 = arith.cmpf oeq, %4, %5 : vector<8x128xf32>
    %cst_4 = arith.constant 0.000000e+00 : f32
    %7 = vector.broadcast %cst_4 : f32 to vector<8x128xf32>
    %8 = arith.select %6, %7, %4 : vector<8x128xi1>, vector<8x128xf32>
    %cst_5 = arith.constant 1.000000e+00 : f32
    %9 = vector.broadcast %cst_5 : f32 to vector<8x128xf32>
    %10 = arith.cmpf oeq, %8, %9 : vector<8x128xf32>
    %cst_6 = arith.constant 5.000000e-01 : f32
    %11 = vector.broadcast %cst_6 : f32 to vector<8x128xf32>
    %12 = arith.mulf %11, %3 : vector<8x128xf32>
    %13 = math.tanh %12 : vector<8x128xf32>
    %cst_7 = arith.constant 5.000000e-01 : f32
    %14 = vector.broadcast %cst_7 : f32 to vector<8x128xf32>
    %15 = arith.mulf %14, %13 : vector<8x128xf32>
    %cst_8 = arith.constant 5.000000e-01 : f32
    %16 = vector.broadcast %cst_8 : f32 to vector<8x128xf32>
    %17 = arith.addf %15, %16 : vector<8x128xf32>
    %cst_9 = arith.constant 1.000000e+00 : f32
    %18 = vector.broadcast %cst_9 : f32 to vector<8x128xf32>
    %19 = arith.subf %18, %17 : vector<8x128xf32>
    %cst_10 = arith.constant 5.000000e-02 : f32
    %20 = vector.broadcast %cst_10 : f32 to vector<8x128xf32>
    %21 = arith.addf %19, %20 : vector<8x128xf32>
    %cst_11 = arith.constant 1.000000e+00 : f32
    %22 = vector.broadcast %cst_11 : f32 to vector<8x128xf32>
    %23 = arith.minimumf %21, %22 : vector<8x128xf32>
    %24 = arith.select %10, %17, %23 : vector<8x128xi1>, vector<8x128xf32>
    %cst_12 = arith.constant 9.99999993E-9 : f32
    %25 = vector.broadcast %cst_12 : f32 to vector<8x128xf32>
    %26 = arith.maximumf %24, %25 : vector<8x128xf32>
    %27 = math.log %26 : vector<8x128xf32>
    %cst_13 = arith.constant 5.000000e-02 : f32
    %cst_14 = arith.constant 4.000000e+00 : f32
    %28 = vector.broadcast %cst_13 : f32 to vector<8x128xf32>
    %29 = vector.broadcast %cst_14 : f32 to vector<8x128xf32>
    %30 = arith.select %10, %28, %29 : vector<8x128xi1>, vector<8x128xf32>
    %cst_15 = arith.constant 1.000000e+00 : f32
    %31 = vector.broadcast %cst_15 : f32 to vector<8x128xf32>
    %32 = arith.subf %31, %24 : vector<8x128xf32>
    %33 = math.log %32 : vector<8x128xf32>
    %34 = arith.mulf %30, %33 : vector<8x128xf32>
    %35 = math.exp %34 : vector<8x128xf32>
    %36 = arith.mulf %27, %35 : vector<8x128xf32>
    %c0_16 = arith.constant 0 : index
    %c0_17 = arith.constant 0 : index
    %37 = vector.load %arg4[%c0_16, %c0_17] : memref<8x128xf32, #tpu.memory_space<vmem>>, vector<8x128xf32>
    %38 = arith.addf %37, %36 : vector<8x128xf32>
    %c0_18 = arith.constant 0 : index
    %c0_19 = arith.constant 0 : index
    %39 = vector.load %arg4[%c0_18, %c0_19] : memref<8x128xf32, #tpu.memory_space<vmem>>, vector<8x128xf32>
    tpu.vector_store %arg4[%c0_18, %c0_19], %38 {strides = array<i32>} : memref<8x128xf32, #tpu.memory_space<vmem>>, vector<8x128xf32>,
    return
  }
  func.func @transform_0(%arg0: i32, %arg1: i32) -> (i32, i32) {
    %c0_i32 = arith.constant 0 : i32
    return %arg0, %arg1 : i32, i32
  }
  func.func @transform_1(%arg0: i32, %arg1: i32) -> (i32, i32) {
    %c0_i32 = arith.constant 0 : i32
    return %arg0, %arg1 : i32, i32
  }
  func.func @transform_2(%arg0: i32, %arg1: i32) -> (i32, i32) {
    %c0_i32 = arith.constant 0 : i32
    %c0_i32_0 = arith.constant 0 : i32
    return %arg0, %c0_i32 : i32, i32
  }
}

</mosaic_0001>

<llo_original>
// kernel: asymmetric_loss.1
$region0: #{asymmetric_loss.1}
  #allocation0 [shape = 'u32[]', space=smem, size = 0x4, offset = 0x4, fixed_abs, tag = 'smem constant byte address 0x4 - core index']
  #allocation1 [shape = 'u32[72,128]{1,0:T(1,128)}', space=vmem, size = 0x9000, scoped, tag = 'internal scratch']
  %s0 = inlined_call_operand.hbm [shape: f32[16,128], index: 0, kind: input, shape index: {}]
  %s1 = inlined_call_operand.hbm [shape: f32[16,128], index: 1, kind: input, shape index: {}]
  %s2 = inlined_call_operand.vmem [shape: f32[16,128], index: 2, kind: output, shape index: {}]
  %s3 = sld [smem:[#allocation0]]
  $region53: #{asymmetric_loss.1} parent=0
    _
  %s5 = ssub.s32 1, %s3
  %s6 = scalar_select 0, %s5, %s3
  $region1: #{asymmetric_loss.1} parent=0
    #allocation2 [shape = 'u8[8192]{0}', space=vmem, size = 0x2000, scoped, tag = 'input window, operand 0']
    #allocation3 [shape = 's32[2]{0}', space=sflag, size = 0x8, scoped, tag = 'scoped memory for asymmetric_loss.1']
    #allocation4 [shape = 'u8[8192]{0}', space=vmem, size = 0x2000, scoped, tag = 'input window, operand 1']
    #allocation5 [shape = 's32[2]{0}', space=sflag, size = 0x8, scoped, tag = 'scoped memory for asymmetric_loss.1']
    %7 = vsyncpa [#allocation3], 0
    %s8 = scalar_lea.sflag [#allocation3], 1
    %9 = vsyncpa %s8, 0
    %10 = vsyncpa [#allocation5], 0
    %s11 = scalar_lea.sflag [#allocation5], 1
    %12 = vsyncpa %s11, 0
    loop: start=0, step=1, limit=4
    $region2: #{asymmetric_loss.1} parent=1 // loop_pre_header
      _
    $region3: #{asymmetric_loss.1} parent=1 // loop_header
      %s14 = sphi 0, %s18
      %p15 = scmp.ge.s32.totalorder %s14, 4
      %s21 = sphi 0, %s33
      %s22 = sphi 0, %s29
      %s23 = sphi 0, %s21
      %s24 = sphi 0, %s22
      %s25 = sphi 0, %s23
      %s26 = sphi 0, %s24
      %s38 = sphi 0, %s40
      %s41 = sphi 0, %s38
      %s42 = sphi 0, %s41
      %s58 = sphi 0, %s42
      %s66 = sphi 0, %s68
      %s69 = sphi 0, %s66
      %s70 = sphi 0, %s69
      %s86 = sphi 0, %s70
      %s92 = sphi 0, %s94
      %s95 = sphi 0, %s92
      %s96 = sphi 0, %s95
      %s112 = sphi 0, %s96
    $region4: #{asymmetric_loss.1} parent=1 // loop_header_branch
      %17 = sbr.rel (%p15) target = $region8
    $region5: #{asymmetric_loss.1} parent=1 // loop_body
      %s19 = ssub.s32 %s14, 1
      %s20 = ssub.s32 %s14, 2
      %s27 = sadd.s32 1, %s22
      %p28 = scmp.ge.s32.totalorder %s27, 1
      %s29 = scalar_select %p28, 0, %s27
      %s30 = sadd.s32 1, %s21
      %s31 = scalar_select %p28, %s30, %s21
      %p32 = scmp.ge.s32.totalorder %s31, 2
      %s33 = scalar_select %p32, 0, %s31
      %s34 = ssub.s32 %s21, %s33
      %s35 = ssub.s32 %s22, %s29
      %s36 = sor.u32 %s34, %s35
      %p37 = scmp.eq.s32.totalorder %s36, 0
      %s39 = sadd.s32 %s38, 1
      %s40 = scalar_select %p37, %s38, %s39
      %p43 = pneg %p37
      %p44 = scmp.eq.s32.totalorder %s14, 1
      %p45 = por %p43, %p44
      %p46 = scmp.ne.s32.totalorder %s38, %s41
      %p47 = scmp.eq.s32.totalorder %s14, 0
      %p48 = por %p46, %p47
      %p49 = scmp.ne.s32.totalorder %s38, %s41
      %p50 = scmp.eq.s32.totalorder %s19, 1
      %p51 = por %p49, %p50
      %p52 = scmp.ne.s32.totalorder %s41, %s42
      %p53 = scmp.eq.s32.totalorder %s19, 0
      %p54 = por %p52, %p53
      %p55 = scmp.ne.s32.totalorder %s41, %s42
      %p56 = scmp.eq.s32.totalorder %s20, 1
      %p57 = por %p55, %p56
      %p59 = scmp.ne.s32.totalorder %s42, %s58
      %p60 = scmp.eq.s32.totalorder %s20, 0
      %p61 = por %p59, %p60
      %s62 = ssub.s32 %s21, %s33
      %s63 = ssub.s32 %s22, %s29
      %s64 = sor.u32 %s62, %s63
      %p65 = scmp.eq.s32.totalorder %s64, 0
      %s67 = sadd.s32 %s66, 1
      %s68 = scalar_select %p65, %s66, %s67
      %p71 = pneg %p65
      %p72 = scmp.eq.s32.totalorder %s14, 1
      %p73 = por %p71, %p72
      %p74 = scmp.ne.s32.totalorder %s66, %s69
      %p75 = scmp.eq.s32.totalorder %s14, 0
      %p76 = por %p74, %p75
      %p77 = scmp.ne.s32.totalorder %s66, %s69
      %p78 = scmp.eq.s32.totalorder %s19, 1
      %p79 = por %p77, %p78
      %p80 = scmp.ne.s32.totalorder %s69, %s70
      %p81 = scmp.eq.s32.totalorder %s19, 0
      %p82 = por %p80, %p81
      %p83 = scmp.ne.s32.totalorder %s69, %s70
      %p84 = scmp.eq.s32.totalorder %s20, 1
      %p85 = por %p83, %p84
      %p87 = scmp.ne.s32.totalorder %s70, %s86
      %p88 = scmp.eq.s32.totalorder %s20, 0
      %p89 = por %p87, %p88
      %s90 = ssub.s32 %s21, %s33
      %p91 = scmp.eq.s32.totalorder %s90, 0
      %s93 = sadd.s32 %s92, 1
      %s94 = scalar_select %p91, %s92, %s93
      %p97 = pneg %p91
      %p98 = scmp.eq.s32.totalorder %s14, 1
      %p99 = por %p97, %p98
      %p100 = scmp.ne.s32.totalorder %s92, %s95
      %p101 = scmp.eq.s32.totalorder %s14, 0
      %p102 = por %p100, %p101
      %p103 = scmp.ne.s32.totalorder %s92, %s95
      %p104 = scmp.eq.s32.totalorder %s19, 1
      %p105 = por %p103, %p104
      %p106 = scmp.ne.s32.totalorder %s95, %s96
      %p107 = scmp.eq.s32.totalorder %s19, 0
      %p108 = por %p106, %p107
      %p109 = scmp.ne.s32.totalorder %s95, %s96
      %p110 = scmp.eq.s32.totalorder %s20, 1
      %p111 = por %p109, %p110
      %p113 = scmp.ne.s32.totalorder %s96, %s112
      %p114 = scmp.eq.s32.totalorder %s20, 0
      %p115 = por %p113, %p114
      %p116 = scmp.le.s32.totalorder 1, %s14
      %p117 = scmp.lt.s32.totalorder %s14, 3
      %p118 = pnand %p116, %p117
      %p119 = pneg %p118
      // Predicated region
      $region9: #{asymmetric_loss.1} parent=5 // pred_check
        _
      $region10: #{asymmetric_loss.1} parent=5 // pred_check_branch
        %121 = sbr.rel (%p118) target = $region12
      $region11: #{asymmetric_loss.1} parent=5 // pred_region
        %s122 = ssub.s32 %s14, 1
      $region12: #{asymmetric_loss.1} parent=5 // pred_fallthru
        _
      %p123 = scmp.lt.s32.totalorder %s14, 2
      // Predicated region
      $region13: #{asymmetric_loss.1} parent=5 // pred_check
        %p124 = pneg %p123
      $region14: #{asymmetric_loss.1} parent=5 // pred_check_branch
        %126 = sbr.rel (%p124) target = $region16
      $region15: #{asymmetric_loss.1} parent=5 // pred_region
        // Predicated region
        $region17: #{asymmetric_loss.1} parent=15 // pred_check
          %p127 = pneg %p48
        $region18: #{asymmetric_loss.1} parent=15 // pred_check_branch
          %129 = sbr.rel (%p127) target = $region20
        $region19: #{asymmetric_loss.1} parent=15 // pred_region
          %s130 = sand.u32 %s38, 1
          %s131 = scalar_lea.sflag [#allocation3], %s130
          %s132 = sand.u32 %s38, 1
          %s133 = smul.addr %s132, 8
          %s134 = scalar_lea.vmem [#allocation2], %s133
          %136 = vsyncadd %s131, 0
          %s137 = sadd.s32 %s22, %s21
          %s138 = smul.addr %s137, 8
          %s139 = scalar_lea.hbm %s0, %s138
          %s141 = sshll.u32 %s139, 4
          %s142 = int_to_ptr.hbm [resolvable:$true] %s141
          %s143 = sshll.u32 %s134, 4
          %s144 = int_to_ptr.vmem [resolvable:$true] %s143
          %146 = dma.hbm_to_vmem [thread:$0]  %s142, 128, %s144, %s131
        $region20: #{asymmetric_loss.1} parent=15 // pred_fallthru
          _
        // Predicated region
        $region21: #{asymmetric_loss.1} parent=15 // pred_check
          %p147 = pneg %p76
        $region22: #{asymmetric_loss.1} parent=15 // pred_check_branch
          %149 = sbr.rel (%p147) target = $region24
        $region23: #{asymmetric_loss.1} parent=15 // pred_region
          %s150 = sand.u32 %s66, 1
          %s151 = scalar_lea.sflag [#allocation5], %s150
          %s152 = sand.u32 %s66, 1
          %s153 = smul.addr %s152, 8
          %s154 = scalar_lea.vmem [#allocation4], %s153
          %156 = vsyncadd %s151, 0
          %s157 = sadd.s32 %s22, %s21
          %s158 = smul.addr %s157, 8
          %s159 = scalar_lea.hbm %s1, %s158
          %s161 = sshll.u32 %s159, 4
          %s162 = int_to_ptr.hbm [resolvable:$true] %s161
          %s163 = sshll.u32 %s154, 4
          %s164 = int_to_ptr.vmem [resolvable:$true] %s163
          %166 = dma.hbm_to_vmem [thread:$0]  %s162, 128, %s164, %s151
        $region24: #{asymmetric_loss.1} parent=15 // pred_fallthru
          _
      $region16: #{asymmetric_loss.1} parent=5 // pred_fallthru
        _
      %p167 = scmp.le.s32.totalorder 1, %s14
      %p168 = scmp.lt.s32.totalorder %s14, 3
      %p169 = pnand %p167, %p168
      %p170 = pneg %p169
      // Predicated region
      $region25: #{asymmetric_loss.1} parent=5 // pred_check
        _
      $region26: #{asymmetric_loss.1} parent=5 // pred_check_branch
        %172 = sbr.rel (%p169) target = $region28
      $region27: #{asymmetric_loss.1} parent=5 // pred_region
        %s173 = ssub.s32 %s14, 1
        %s174 = sand.u32 %s41, 1
        %s175 = scalar_lea.sflag [#allocation3], %s174
        %s176 = sand.u32 %s41, 1
        %s177 = smul.addr %s176, 8
        %s178 = scalar_lea.vmem [#allocation2], %s177
        // Predicated region
        $region29: #{asymmetric_loss.1} parent=27 // pred_check
          %p179 = pneg %p54
        $region30: #{asymmetric_loss.1} parent=27 // pred_check_branch
          %181 = sbr.rel (%p179) target = $region32
        $region31: #{asymmetric_loss.1} parent=27 // pred_region
          %183 = dma.done %s175, 128
        $region32: #{asymmetric_loss.1} parent=27 // pred_fallthru
          _
        %s184 = sand.u32 %s69, 1
        %s185 = scalar_lea.sflag [#allocation5], %s184
        %s186 = sand.u32 %s69, 1
        %s187 = smul.addr %s186, 8
        %s188 = scalar_lea.vmem [#allocation4], %s187
        // Predicated region
        $region33: #{asymmetric_loss.1} parent=27 // pred_check
          %p189 = pneg %p82
        $region34: #{asymmetric_loss.1} parent=27 // pred_check_branch
          %191 = sbr.rel (%p189) target = $region36
        $region35: #{asymmetric_loss.1} parent=27 // pred_region
          %193 = dma.done %s185, 128
        $region36: #{asymmetric_loss.1} parent=27 // pred_fallthru
          _
        %s194 = sand.u32 %s41, 1
        %s195 = scalar_lea.sflag [#allocation3], %s194
        %s196 = sand.u32 %s41, 1
        %s197 = smul.addr %s196, 8
        %s198 = scalar_lea.vmem [#allocation2], %s197
        %p199 = pneg %p54
        %p200 = pneg %p51
        %s201 = sand.u32 %s69, 1
        %s202 = scalar_lea.sflag [#allocation5], %s201
        %s203 = sand.u32 %s69, 1
        %s204 = smul.addr %s203, 8
        %s205 = scalar_lea.vmem [#allocation4], %s204
        %p206 = pneg %p82
        %p207 = pneg %p79
        %p208 = pneg %p108
        %p209 = pneg %p105
        %p210 = scmp.lt.s32.totalorder %s23, 1
        %s211 = scalar_select %p210, %s23, 1
        %s212 = smul.addr %s211, 8
        %s213 = scalar_lea.vmem %s2, %s212
        %p214 = scmp.lt.s32.totalorder %s23, 1
        %s215 = scalar_select %p214, %s23, 1
        %s216 = smul.addr %s215, 8
        %s217 = scalar_lea.vmem %s2, %s216
        %p218 = scmp.eq.s32.totalorder %s24, 0
        // Predicated region
        $region37: #{asymmetric_loss.1} parent=27 // pred_check
          %p219 = pneg %p218
        $region38: #{asymmetric_loss.1} parent=27 // pred_check_branch
          %221 = sbr.rel (%p219) target = $region40
        $region39: #{asymmetric_loss.1} parent=27 // pred_region
          %222 = vst [vmem:[%s217] sm:$0xff] 0.0
        $region40: #{asymmetric_loss.1} parent=27 // pred_fallthru
          _
        %v223 = vld [vmem:[%s178] sm:$0xff]
        %v224 = vld [vmem:[%s188] sm:$0xff]
        %vm225 = vcmp.eq.f32.partialorder %v224, -1.0
        %v226 = vsel %vm225, 0.0, %v224
        %vm227 = vcmp.eq.f32.partialorder %v226, 1.0
        %v228 = vmul.f32 %v223, 0.5
        %v229 = vtanh.pop %v228
        %v230 = vmul.f32 %v229, 0.5
        %v231 = vadd.f32 %v230, 0.5
        %v232 = vsub.f32 1.0, %v231
        %v233 = vadd.f32 %v232, 0.05
        %v234 = vmin.f32 %v233, 1.0
        %v235 = vsel %vm227, %v231, %v234
        %v236 = vmax.f32 %v235, 1e-08
        %v237 = vlog2.pop %v236
        %v238 = vmul.f32 %v237, 0.6931472
        %v239 = vsel %vm227, 0.05, 4.0
        %v240 = vsub.f32 1.0, %v235
        %v241 = vlog2.pop %v240
        %v242 = vmul.f32 %v241, 0.6931472
        %v243 = vmul.f32 %v239, %v242
        %v244 = vmul.f32 %v243, 1.442695
        %v245 = vpow.pop %v244
        %v246 = vmul.f32 %v238, %v245
        %v247 = vld [vmem:[%s217] sm:$0xff]
        %v248 = vadd.f32 %v247, %v246
        %249 = vst [vmem:[%s217] sm:$0xff] %v248
        %p250 = scmp.lt.s32.totalorder %s23, 1
        %s251 = scalar_select %p250, %s23, 1
        %s252 = smul.addr %s251, 8
        %s253 = scalar_lea.vmem %s2, %s252
        // Predicated region
        $region41: #{asymmetric_loss.1} parent=27 // pred_check
          %p254 = pneg %p105
        $region42: #{asymmetric_loss.1} parent=27 // pred_check_branch
          %256 = sbr.rel (%p254) target = $region44
        $region43: #{asymmetric_loss.1} parent=27 // pred_region
          _
        $region44: #{asymmetric_loss.1} parent=27 // pred_fallthru
          _
      $region28: #{asymmetric_loss.1} parent=5 // pred_fallthru
        _
      %p257 = scmp.le.s32.totalorder 2, %s14
      // Predicated region
      $region45: #{asymmetric_loss.1} parent=5 // pred_check
        %p258 = pneg %p257
      $region46: #{asymmetric_loss.1} parent=5 // pred_check_branch
        %260 = sbr.rel (%p258) target = $region48
      $region47: #{asymmetric_loss.1} parent=5 // pred_region
        %s261 = ssub.s32 %s14, 2
        // Predicated region
        $region49: #{asymmetric_loss.1} parent=47 // pred_check
          %p262 = pneg %p111
        $region50: #{asymmetric_loss.1} parent=47 // pred_check_branch
          %264 = sbr.rel (%p262) target = $region52
        $region51: #{asymmetric_loss.1} parent=47 // pred_region
          %p265 = scmp.lt.s32.totalorder %s25, 1
          %s266 = scalar_select %p265, %s25, 1
          %s267 = smul.addr %s266, 8
          %s268 = scalar_lea.vmem %s2, %s267
        $region52: #{asymmetric_loss.1} parent=47 // pred_fallthru
          _
      $region48: #{asymmetric_loss.1} parent=5 // pred_fallthru
        _
    $region6: #{asymmetric_loss.1} parent=1 // loop_footer
      %s18 = sadd.s32 1, %s14
    $region7: #{asymmetric_loss.1} parent=1 // loop_footer_branch
      %13 = sbr.rel target = $region3
    $region8: #{asymmetric_loss.1} parent=1 // loop_exit
      _
    %269 = vsyncpa [#allocation3], 1
    %s270 = scalar_lea.sflag [#allocation3], 1
    %271 = vsyncpa %s270, 1
    %272 = vsyncpa [#allocation5], 1
    %s273 = scalar_lea.sflag [#allocation5], 1
    %274 = vsyncpa %s273, 1

</llo_original>
